<compile_context>
chip_gen: v6e
topology: v6e:2x2x1
jax: 0.10.0
libtpu: 0.0.40
codegen_flags: <defaults>
</compile_context>

<pallas_src>
import math

import jax
import jax.numpy as jnp
from jax.experimental import pallas as pl
from jax.experimental.pallas import tpu as pltpu


def mymodule_kernel(x_ref, wt_ref, b_ref, ones_ref, o_ref):
    x = x_ref[...]            # (TB, F_in)        streamed per grid step
    wt = wt_ref[...]          # (F_in, F_out)     VMEM-resident across the grid
    b = b_ref[...]            # (1, F_out)        VMEM-resident

    # nn.Linear: x @ W^T + b, with W pre-transposed in the wrapper -> clean MXU matmul.
    z = jnp.dot(x, wt, preferred_element_type=jnp.float32) + b        # (TB, F_out)

    # swish / SiLU (VPU + EUP)
    y = z * jax.nn.sigmoid(z)

    # F.linear(y, ones(F_out), bias=None) == row-sum over features.
    # Done on the MXU against a resident ones row, contracting the feature axis of
    # both operands, so the result is already lane-dense with batch on the lane axis.
    s = jax.lax.dot_general(
        ones_ref[...], y,
        dimension_numbers=(((1,), (1,)), ((), ())),
        preferred_element_type=jnp.float32,
    )                                                                  # (1, TB)

    # gelu(approximate='tanh')
    c = math.sqrt(2.0 / math.pi)
    o_ref[...] = 0.5 * s * (1.0 + jnp.tanh(c * (s + 0.044715 * s * s * s)))


def mymodule_forward(x, w, b, *, tb=512):
    """x: (B, in_features) f32, w: (out_features, in_features), b: (out_features,)."""
    B, f_in = x.shape
    f_out = w.shape[0]

    # Pre-transpose the weight once outside the kernel (free layout plumbing).
    wt = jnp.asarray(w).T.astype(jnp.float32)                  # (f_in, f_out)
    bias = jnp.asarray(b).astype(jnp.float32).reshape(1, f_out)
    ones_row = jnp.ones((1, f_out), dtype=jnp.float32)

    # Batch tiling: one tile if B is small; otherwise 128-aligned tiles (tb is a
    # multiple of 128 so both the x block and the lane-dense output block satisfy
    # the (8,128) layout rules). tb=512 keeps per-tile VMEM tiny even on v7x (64 MiB).
    if B <= tb:
        TB = B
        B_pad = B
    else:
        TB = tb
        B_pad = pl.cdiv(B, TB) * TB
    num_tiles = B_pad // TB

    x_p = x.astype(jnp.float32)
    if B_pad != B:
        x_p = jnp.pad(x_p, ((0, B_pad - B), (0, 0)))

    out = pl.pallas_call(
        mymodule_kernel,
        out_shape=jax.ShapeDtypeStruct((1, B_pad), jnp.float32),
        grid=(num_tiles,),
        in_specs=[
            pl.BlockSpec((TB, f_in), lambda i: (i, 0),
                         memory_space=pltpu.MemorySpace.VMEM),
            pl.BlockSpec((f_in, f_out), lambda i: (0, 0),
                         memory_space=pltpu.MemorySpace.VMEM),
            pl.BlockSpec((1, f_out), lambda i: (0, 0),
                         memory_space=pltpu.MemorySpace.VMEM),
            pl.BlockSpec((1, f_out), lambda i: (0, 0),
                         memory_space=pltpu.MemorySpace.VMEM),
        ],
        out_specs=pl.BlockSpec((1, TB), lambda i: (0, i),
                               memory_space=pltpu.MemorySpace.VMEM),
        compiler_params=pltpu.CompilerParams(
            dimension_semantics=("parallel",),
            vmem_limit_bytes=64 * 1024 * 1024,
        ),
    )(x_p, wt, bias, ones_row)

    return out[0, :B]  # (B,) to match the PyTorch output shape


if __name__ == "__main__":
    B, in_features, out_features = 8, 32, 16

    key = jax.random.PRNGKey(0)
    kx, kw, kb = jax.random.split(key, 3)

    x = jax.random.normal(kx, (B, in_features), dtype=jnp.float32)
    bound = 1.0 / math.sqrt(in_features)  # nn.Linear default init bounds
    w = jax.random.uniform(kw, (out_features, in_features), jnp.float32, -bound, bound)
    b = jax.random.uniform(kb, (out_features,), jnp.float32, -bound, bound)

    out = mymodule_forward(x, w, b)
    jax.block_until_ready(out)

    # Pure-JAX reference (same math, no Pallas).
    y_ref = x @ w.T + b
    y_ref = y_ref * jax.nn.sigmoid(y_ref)
    s_ref = jnp.sum(y_ref, axis=-1)
    c = math.sqrt(2.0 / math.pi)
    ref = 0.5 * s_ref * (1.0 + jnp.tanh(c * (s_ref + 0.044715 * s_ref**3)))
    assert out.shape == (B,), out.shape
    assert jnp.allclose(out, ref, atol=1e-5, rtol=1e-5), (out, ref)

    print("KERNEL_OK")
</pallas_src>

<mosaic_0001>
module attributes {stable_mosaic.version = 11 : i64} {
  func.func @mymodule_kernel(%arg0: i32, %arg1: memref<8x32xf32, #tpu.memory_space<vmem>>, %arg2: memref<32x16xf32, #tpu.memory_space<vmem>>, %arg3: memref<1x16xf32, #tpu.memory_space<vmem>>, %arg4: memref<1x16xf32, #tpu.memory_space<vmem>>, %arg5: memref<1x8xf32, #tpu.memory_space<vmem>>) attributes {dimension_semantics = [#tpu.dimension_semantics<parallel>], iteration_bounds = array<i64: 1>, scalar_prefetch = 0 : i64, scratch_operands = 0 : i64, tpu.core_type = #tpu.core_type<tc>, window_params = [{transform_indices = @transform_0, window_bounds = array<i64: 8, 32>}, {pipeline_mode = #tpu.pipeline_mode<synchronous>, transform_indices = @transform_1, window_bounds = array<i64: 32, 16>}, {pipeline_mode = #tpu.pipeline_mode<synchronous>, transform_indices = @transform_2, window_bounds = array<i64: 1, 16>}, {pipeline_mode = #tpu.pipeline_mode<synchronous>, transform_indices = @transform_3, window_bounds = array<i64: 1, 16>}, {transform_indices = @transform_4, window_bounds = array<i64: 1, 8>}]} {
    %c0 = arith.constant 0 : index
    %c0_0 = arith.constant 0 : index
    %0 = vector.load %arg1[%c0, %c0_0] : memref<8x32xf32, #tpu.memory_space<vmem>>, vector<8x32xf32>
    %c0_1 = arith.constant 0 : index
    %c0_2 = arith.constant 0 : index
    %1 = vector.load %arg2[%c0_1, %c0_2] : memref<32x16xf32, #tpu.memory_space<vmem>>, vector<32x16xf32>
    %c0_3 = arith.constant 0 : index
    %c0_4 = arith.constant 0 : index
    %2 = vector.load %arg3[%c0_3, %c0_4] : memref<1x16xf32, #tpu.memory_space<vmem>>, vector<1x16xf32>
    %cst = arith.constant dense<0.000000e+00> : vector<8x16xf32>
    %3 = tpu.matmul %0, %1, %cst {dimension_numbers = #tpu.dot_dimension_numbers<[1], [0], [0], [1], [0, 0, 1, 1], [], []>} : vector<8x32xf32>, vector<32x16xf32>, vector<8x16xf32> -> vector<8x16xf32>
    %4 = vector.broadcast %2 : vector<1x16xf32> to vector<8x16xf32>
    %5 = arith.addf %3, %4 : vector<8x16xf32>
    %6 = arith.negf %5 : vector<8x16xf32>
    %7 = math.exp %6 : vector<8x16xf32>
    %cst_5 = arith.constant 1.000000e+00 : f32
    %8 = vector.broadcast %cst_5 : f32 to vector<8x16xf32>
    %9 = arith.addf %8, %7 : vector<8x16xf32>
    %10 = arith.divf %8, %9 : vector<8x16xf32>
    %11 = arith.mulf %5, %10 : vector<8x16xf32>
    %c0_6 = arith.constant 0 : index
    %c0_7 = arith.constant 0 : index
    %12 = vector.load %arg4[%c0_6, %c0_7] : memref<1x16xf32, #tpu.memory_space<vmem>>, vector<1x16xf32>
    %cst_8 = arith.constant dense<0.000000e+00> : vector<1x8xf32>
    %13 = tpu.matmul %12, %11, %cst_8 {dimension_numbers = #tpu.dot_dimension_numbers<[1], [1], [0], [0], [0, 0, 1, 0], [], []>} : vector<1x16xf32>, vector<8x16xf32>, vector<1x8xf32> -> vector<1x8xf32>
    %cst_9 = arith.constant 5.000000e-01 : f32
    %14 = vector.broadcast %cst_9 : f32 to vector<1x8xf32>
    %15 = arith.mulf %14, %13 : vector<1x8xf32>
    %cst_10 = arith.constant 4.471500e-02 : f32
    %16 = vector.broadcast %cst_10 : f32 to vector<1x8xf32>
    %17 = arith.mulf %16, %13 : vector<1x8xf32>
    %18 = arith.mulf %17, %13 : vector<1x8xf32>
    %19 = arith.mulf %18, %13 : vector<1x8xf32>
    %20 = arith.addf %13, %19 : vector<1x8xf32>
    %cst_11 = arith.constant 0.797884583 : f32
    %21 = vector.broadcast %cst_11 : f32 to vector<1x8xf32>
    %22 = arith.mulf %21, %20 : vector<1x8xf32>
    %23 = math.tanh %22 : vector<1x8xf32>
    %cst_12 = arith.constant 1.000000e+00 : f32
    %24 = vector.broadcast %cst_12 : f32 to vector<1x8xf32>
    %25 = arith.addf %24, %23 : vector<1x8xf32>
    %26 = arith.mulf %15, %25 : vector<1x8xf32>
    %c0_13 = arith.constant 0 : index
    %c0_14 = arith.constant 0 : index
    %27 = vector.load %arg5[%c0_13, %c0_14] : memref<1x8xf32, #tpu.memory_space<vmem>>, vector<1x8xf32>
    tpu.vector_store %arg5[%c0_13, %c0_14], %26 {strides = array<i32>} : memref<1x8xf32, #tpu.memory_space<vmem>>, vector<1x8xf32>,
    return
  }
  func.func @transform_0(%arg0: i32) -> (i32, i32) {
    %c0_i32 = arith.constant 0 : i32
    %c0_i32_0 = arith.constant 0 : i32
    return %arg0, %c0_i32 : i32, i32
  }
  func.func @transform_1(%arg0: i32) -> (i32, i32) {
    %c0_i32 = arith.constant 0 : i32
    %c0_i32_0 = arith.constant 0 : i32
    %c0_i32_1 = arith.constant 0 : i32
    return %c0_i32, %c0_i32_0 : i32, i32
  }
  func.func @transform_2(%arg0: i32) -> (i32, i32) {
    %c0_i32 = arith.constant 0 : i32
    %c0_i32_0 = arith.constant 0 : i32
    %c0_i32_1 = arith.constant 0 : i32
    return %c0_i32, %c0_i32_0 : i32, i32
  }
  func.func @transform_3(%arg0: i32) -> (i32, i32) {
    %c0_i32 = arith.constant 0 : i32
    %c0_i32_0 = arith.constant 0 : i32
    %c0_i32_1 = arith.constant 0 : i32
    return %c0_i32, %c0_i32_0 : i32, i32
  }
  func.func @transform_4(%arg0: i32) -> (i32, i32) {
    %c0_i32 = arith.constant 0 : i32
    %c0_i32_0 = arith.constant 0 : i32
    return %c0_i32, %arg0 : i32, i32
  }
}

</mosaic_0001>

<llo_original>
// kernel: tpu_custom_call.1
$region0: #{tpu_custom_call.1}
  #allocation0 [shape = 'u32[]', space=smem, size = 0x4, offset = 0x4, fixed_abs, tag = 'smem constant byte address 0x4 - core index']
  #allocation1 [shape = 'u32[144,128]{1,0:T(1,128)}', space=vmem, size = 0x12000, scoped, tag = 'internal scratch']
  %s0 = inlined_call_operand.vmem [shape: f32[8,32], index: 0, kind: input, shape index: {}]
  %s1 = inlined_call_operand.vmem [shape: f32[32,16], index: 1, kind: input, shape index: {}]
  %s2 = inlined_call_operand.vmem [shape: f32[1,16], index: 2, kind: input, shape index: {}]
  %s3 = inlined_call_operand.vmem [shape: f32[1,16], index: 3, kind: input, shape index: {}]
  %s4 = inlined_call_operand.hbm [shape: f32[1,8], index: 4, kind: output, shape index: {}]
  %s5 = sld [smem:[#allocation0]]
  $region26: #{tpu_custom_call.1} parent=0
    _
  %s7 = ssub.s32 1, %s5
  %s8 = scalar_select 0, %s7, %s5
  $region1: #{tpu_custom_call.1} parent=0
    #allocation2 [shape = 'u8[512]{0}', space=vmem, size = 0x400, scoped, tag = 'output window, operand 0, single buffered']
    #allocation3 [shape = 's32[1]{0}', space=sflag, size = 0x4, scoped, tag = 'scoped memory for tpu_custom_call.1']
    %9 = vsyncpa [#allocation3], 0
    // Predicated region
    $region2: #{tpu_custom_call.1} parent=1 // pred_check
      _
    $region3: #{tpu_custom_call.1} parent=1 // pred_check_branch
      %11 = sbr.rel (0) target = $region5
    $region4: #{tpu_custom_call.1} parent=1 // pred_region
      _
    $region5: #{tpu_custom_call.1} parent=1 // pred_fallthru
      _
    // Predicated region
    $region6: #{tpu_custom_call.1} parent=1 // pred_check
      _
    $region7: #{tpu_custom_call.1} parent=1 // pred_check_branch
      %13 = sbr.rel (0) target = $region9
    $region8: #{tpu_custom_call.1} parent=1 // pred_region
      _
    $region9: #{tpu_custom_call.1} parent=1 // pred_fallthru
      _
    // Predicated region
    $region10: #{tpu_custom_call.1} parent=1 // pred_check
      _
    $region11: #{tpu_custom_call.1} parent=1 // pred_check_branch
      %15 = sbr.rel (0) target = $region13
    $region12: #{tpu_custom_call.1} parent=1 // pred_region
      _
    $region13: #{tpu_custom_call.1} parent=1 // pred_fallthru
      _
    // Predicated region
    $region14: #{tpu_custom_call.1} parent=1 // pred_check
      _
    $region15: #{tpu_custom_call.1} parent=1 // pred_check_branch
      %17 = sbr.rel (0) target = $region17
    $region16: #{tpu_custom_call.1} parent=1 // pred_region
      _
    $region17: #{tpu_custom_call.1} parent=1 // pred_fallthru
      _
    %v18 = vld [vmem:[%s0] sm:$0xff]
    %v19 = vld [vmem:[%s1] sm:$0xff]
    %v20 = vld [vmem:[%s1 + $0x8] sm:$0xff]
    %v21 = vld [vmem:[%s1 + $0x10] sm:$0xff]
    %v22 = vld [vmem:[%s1 + $0x18] sm:$0xff]
    %v23 = vld [vmem:[%s2] sm:$0x1]
    %v25 = vlaneseq
    %v26 = vshrl.u32 %v25, 7
    %v27 = vsub.s32 0, %v26
    %v28 = vrot.slane %v23, %v27
    %vm30 = vcmask 261120
    %v32 = vsel %vm30, %v18, 0
    %34 = vmatprep.subr.mxu0 0.0
    %35 = vmatpush1.msra.mxu0 0.0
    %36 = vmatprep.subr.mxu0 0.0
    %37 = vmatpush1.msra.mxu0 0.0
    %38 = vmatprep.subr.mxu0 0.0
    %39 = vmatpush1.msra.mxu0 0.0
    %40 = vmatprep.subr.mxu0 0.0
    %41 = vmatpush1.msra.mxu0 0.0
    %42 = vmatprep.subr.mxu0 0.0
    %43 = vmatpush1.msra.mxu0 0.0
    %44 = vmatprep.subr.mxu0 0.0
    %45 = vmatpush1.msra.mxu0 0.0
    %46 = vmatprep.subr.mxu0 0.0
    %47 = vmatpush1.msra.mxu0 0.0
    %48 = vmatprep.subr.mxu0 0.0
    %49 = vmatpush1.msra.mxu0 0.0
    %50 = vmatprep.subr.mxu0 0.0
    %51 = vmatpush1.msra.mxu0 0.0
    %52 = vmatprep.subr.mxu0 0.0
    %53 = vmatpush1.msra.mxu0 0.0
    %54 = vmatprep.subr.mxu0 0.0
    %55 = vmatpush1.msra.mxu0 0.0
    %56 = vmatprep.subr.mxu0 0.0
    %57 = vmatpush1.msra.mxu0 0.0
    %58 = vmatprep.subr.mxu0 0.0
    %59 = vmatpush1.msra.mxu0 %v22
    %60 = vmatprep.subr.mxu0 0.0
    %61 = vmatpush1.msra.mxu0 %v21
    %62 = vmatprep.subr.mxu0 0.0
    %63 = vmatpush1.msra.mxu0 %v20
    %64 = vmatprep.subr.mxu0 0.0
    %65 = vmatpush1.msra.mxu0 %v19
    %66 = vmatprep.subr.mxu0 0.0
    %67 = vmatpush2.msra.mxu0 0.0
    %68 = vmatprep.subr.mxu0 0.0
    %69 = vmatpush2.msra.mxu0 0.0
    %70 = vmatprep.subr.mxu0 0.0
    %71 = vmatpush2.msra.mxu0 0.0
    %72 = vmatprep.subr.mxu0 0.0
    %73 = vmatpush2.msra.mxu0 0.0
    %74 = vmatprep.subr.mxu0 0.0
    %75 = vmatpush2.msra.mxu0 0.0
    %76 = vmatprep.subr.mxu0 0.0
    %77 = vmatpush2.msra.mxu0 0.0
    %78 = vmatprep.subr.mxu0 0.0
    %79 = vmatpush2.msra.mxu0 0.0
    %80 = vmatprep.subr.mxu0 0.0
    %81 = vmatpush2.msra.mxu0 0.0
    %82 = vmatprep.subr.mxu0 0.0
    %83 = vmatpush2.msra.mxu0 0.0
    %84 = vmatprep.subr.mxu0 0.0
    %85 = vmatpush2.msra.mxu0 0.0
    %86 = vmatprep.subr.mxu0 0.0
    %87 = vmatpush2.msra.mxu0 0.0
    %88 = vmatprep.subr.mxu0 0.0
    %89 = vmatpush2.msra.mxu0 0.0
    %90 = vmatprep.subr.mxu0 0.0
    %91 = vmatpush2.msra.mxu0 0.0
    %92 = vmatprep.subr.mxu0 0.0
    %93 = vmatpush2.msra.mxu0 0.0
    %94 = vmatprep.subr.mxu0 0.0
    %95 = vmatpush2.msra.mxu0 0.0
    %96 = vmatprep.subr.mxu0 0.0
    %97 = vmatpush2.msra.mxu0 0.0
    %98 = vmatprep.mubr.f32.mxu0 0.0
    %99 = vmatmul.mubr.f32.gmra.mxu0 %v32
    %v100 = vpop.f32.mrf.mxu0
    %v101 = vadd.f32 %v28, %v100
    %v102 = vpop.f32.mrf.mxu0
    %103 = vdwg.mxu0
    %v104 = vxor.u32 %v101, 2147483648
    %v105 = vmul.f32 %v104, 1.442695
    %v106 = vpow.pop %v105
    %v107 = vadd.f32 %v106, 1.0
    %v108 = vrcp.pop %v107
    %v109 = vmul.f32 1.0, %v108
    %v110 = vmul.f32 %v101, %v109
    %v111 = vld [vmem:[%s3] sm:$0x1]
    %vm112 = vcmask 130048
    %v114 = vsel %vm112, %v111, 0
    %v117 = vsel %vm112, %v110, 0
    %119 = vmatprep.subr.mxu0 0.0
    %120 = vmatpush1.xpose.msra.mxu0 0.0
    %121 = vmatprep.subr.mxu0 0.0
    %122 = vmatpush1.xpose.msra.mxu0 0.0
    %123 = vmatprep.subr.mxu0 0.0
    %124 = vmatpush1.xpose.msra.mxu0 0.0
    %125 = vmatprep.subr.mxu0 0.0
    %126 = vmatpush1.xpose.msra.mxu0 0.0
    %127 = vmatprep.subr.mxu0 0.0
    %128 = vmatpush1.xpose.msra.mxu0 0.0
    %129 = vmatprep.subr.mxu0 0.0
    %130 = vmatpush1.xpose.msra.mxu0 0.0
    %131 = vmatprep.subr.mxu0 0.0
    %132 = vmatpush1.xpose.msra.mxu0 0.0
    %133 = vmatprep.subr.mxu0 0.0
    %134 = vmatpush1.xpose.msra.mxu0 0.0
    %135 = vmatprep.subr.mxu0 0.0
    %136 = vmatpush1.xpose.msra.mxu0 0.0
    %137 = vmatprep.subr.mxu0 0.0
    %138 = vmatpush1.xpose.msra.mxu0 0.0
    %139 = vmatprep.subr.mxu0 0.0
    %140 = vmatpush1.xpose.msra.mxu0 0.0
    %141 = vmatprep.subr.mxu0 0.0
    %142 = vmatpush1.xpose.msra.mxu0 0.0
    %143 = vmatprep.subr.mxu0 0.0
    %144 = vmatpush1.xpose.msra.mxu0 0.0
    %145 = vmatprep.subr.mxu0 0.0
    %146 = vmatpush1.xpose.msra.mxu0 0.0
    %147 = vmatprep.subr.mxu0 0.0
    %148 = vmatpush1.xpose.msra.mxu0 0.0
    %149 = vmatprep.subr.mxu0 0.0
    %150 = vmatpush1.xpose.msra.mxu0 %v117
    %151 = vmatprep.subr.mxu0 0.0
    %152 = vmatpush2.xpose.msra.mxu0 0.0
    %153 = vmatprep.subr.mxu0 0.0
    %154 = vmatpush2.xpose.msra.mxu0 0.0
    %155 = vmatprep.subr.mxu0 0.0
    %156 = vmatpush2.xpose.msra.mxu0 0.0
    %157 = vmatprep.subr.mxu0 0.0
    %158 = vmatpush2.xpose.msra.mxu0 0.0
    %159 = vmatprep.subr.mxu0 0.0
    %160 = vmatpush2.xpose.msra.mxu0 0.0
    %161 = vmatprep.subr.mxu0 0.0
    %162 = vmatpush2.xpose.msra.mxu0 0.0
    %163 = vmatprep.subr.mxu0 0.0
    %164 = vmatpush2.xpose.msra.mxu0 0.0
    %165 = vmatprep.subr.mxu0 0.0
    %166 = vmatpush2.xpose.msra.mxu0 0.0
    %167 = vmatprep.subr.mxu0 0.0
    %168 = vmatpush2.xpose.msra.mxu0 0.0
    %169 = vmatprep.subr.mxu0 0.0
    %170 = vmatpush2.xpose.msra.mxu0 0.0
    %171 = vmatprep.subr.mxu0 0.0
    %172 = vmatpush2.xpose.msra.mxu0 0.0
    %173 = vmatprep.subr.mxu0 0.0
    %174 = vmatpush2.xpose.msra.mxu0 0.0
    %175 = vmatprep.subr.mxu0 0.0
    %176 = vmatpush2.xpose.msra.mxu0 0.0
    %177 = vmatprep.subr.mxu0 0.0
    %178 = vmatpush2.xpose.msra.mxu0 0.0
    %179 = vmatprep.subr.mxu0 0.0
    %180 = vmatpush2.xpose.msra.mxu0 0.0
    %181 = vmatprep.subr.mxu0 0.0
    %182 = vmatpush2.xpose.msra.mxu0 0.0
    %183 = vmatprep.mubr.f32.mxu0 0.0
    %184 = vmatmul.mubr.f32.gmra.mxu0 %v114
    %v185 = vpop.f32.mrf.mxu0
    %v186 = vadd.f32 0.0, %v185
    %v187 = vpop.f32.mrf.mxu0
    %188 = vdwg.mxu0
    %v189 = vmul.f32 %v186, 0.5
    %v190 = vmul.f32 %v186, 0.044715
    %v191 = vmul.f32 %v190, %v186
    %v192 = vmul.f32 %v191, %v186
    %v193 = vadd.f32 %v186, %v192
    %v194 = vmul.f32 %v193, 0.7978846
    %v195 = vtanh.pop %v194
    %v196 = vadd.f32 %v195, 1.0
    %v197 = vmul.f32 %v189, %v196
    %vm198 = vcmask 57344
    %199 = vst.msk [vmem:[#allocation2] sm:$0x1] %vm198, %v197
    // Predicated region
    $region18: #{tpu_custom_call.1} parent=1 // pred_check
      _
    $region19: #{tpu_custom_call.1} parent=1 // pred_check_branch
      %201 = sbr.rel (0) target = $region21
    $region20: #{tpu_custom_call.1} parent=1 // pred_region
      %s203 = ssub.s32 16, 16
      %204 = vsyncadd [#allocation3], %s203
      %s206 = sshll.u32 [#allocation2], 4
      %s207 = int_to_ptr.vmem [resolvable:$true] %s206
      %209 = dma.vmem_to_hbm [thread:$0]  %s207, 16, %s4, [#allocation3]
    $region21: #{tpu_custom_call.1} parent=1 // pred_fallthru
      _
    // Predicated region
    $region22: #{tpu_custom_call.1} parent=1 // pred_check
      _
    $region23: #{tpu_custom_call.1} parent=1 // pred_check_branch
      %211 = sbr.rel (0) target = $region25
    $region24: #{tpu_custom_call.1} parent=1 // pred_region
      %212 = dma.done [#allocation3], 16
    $region25: #{tpu_custom_call.1} parent=1 // pred_fallthru
      _
    %213 = vsyncpa [#allocation3], 1

</llo_original>
